<compile_context>
chip_gen: v6e
topology: v6e:2x2x1
jax: 0.10.0
libtpu: 0.0.40
codegen_flags: <defaults>
</compile_context>

<pallas_src>
from functools import partial

import jax
import jax.numpy as jnp
from jax.experimental import pallas as pl
from jax.experimental.pallas import tpu as pltpu

_PAD_LOGIT = -1e4  # representable in f16/bf16/f32; exp(-|pad|) == 0 -> pads add exactly 0


def _sam_stats_kernel(x_ref, t_ref, out_ref, *, binary_mask):
    """Accumulate per-row statistics into a lane-dense (n_stats, TR, 128) slab.

    Stat rows (lane-summed and un-folded in the wrapper epilogue):
      0: sum(sigmoid(x) * t)      dice intersection
      1: sum(sigmoid(x)^2)        dice pred_o    (squared_pred=True)
      2: sum(t^2)                 dice ground_o  (== sum(t) when binary)
      3: sum(BCEWithLogits(x,t))  elementwise BCE sum (for the mean)
      4: sum((x > 0) & (t != 0))  hard intersection
      5: sum(x > 0)               |hard prediction|
      6: sum(t != 0)              |gt|  (omitted when binary: equals row 2)
    """
    s_idx = pl.program_id(1)

    @pl.when(s_idx == 0)
    def _init():
        out_ref[...] = jnp.zeros_like(out_ref)

    # Cast from the (possibly narrow) HBM dtypes; all math stays f32 (v5e's VPU/EUP
    # have no bf16 path and f32 keeps the reductions accurate).
    x = x_ref[...].astype(jnp.float32)
    t = t_ref[...].astype(jnp.float32)

    # One shared transcendental feeds both the sigmoid and the stable BCE term.
    e = jnp.exp(-jnp.abs(x))
    inv = pl.reciprocal(1.0 + e, approx=False)      # approx=True drifts ~1e-3 vs torch
    p = jnp.where(x >= 0.0, 1.0, e) * inv           # sigmoid(x), numerically stable
    hard = (x > 0.0).astype(jnp.float32)            # == (sigmoid(x) > 0.5)
    # max(x, 0) == x * hard  ->  one fewer op on the saturating VALU slot.
    bce = x * (hard - t) + jnp.log(1.0 + e)         # stable BCEWithLogits

    if binary_mask:
        stats = (p * t, p * p, t, bce, hard * t, hard)
    else:
        gtb = (t != 0.0).astype(jnp.float32)
        stats = (p * t, p * p, t * t, bce, hard * gtb, hard, gtb)

    # Reduce each (TR, TS) product only down to a lane-dense (TR, 128) partial sum:
    # 128-lane chunk slices are tile-aligned, so this is pure VALU adds — no per-step
    # XLU cross-lane reduce and no masked 1-lane-wide accumulators.
    n_chunks = x_ref.shape[1] // 128

    def lane_fold(v):
        acc = v[:, :128]
        for c in range(1, n_chunks):
            acc = acc + v[:, c * 128:(c + 1) * 128]
        return acc

    for i, v in enumerate(stats):
        out_ref[i] += lane_fold(v)


def _pick_tile(dim, align, max_tile):
    """Largest multiple of `align` dividing `dim` and <= max_tile; falls back to the
    full extent (always a legal block shape)."""
    if dim % align != 0:
        return dim
    t = (min(max_tile, dim) // align) * align
    while t >= align:
        if dim % t == 0:
            return t
        t -= align
    return dim


def _fold_factor(r0, s0):
    """Power-of-two factor F folding spatial into rows: (r0, s0) -> (r0*F, ~s0/F).

    Perf-only heuristic (the wrapper re-sums the F partial rows, so any F is
    numerically identical): aim for folded rows that are a multiple of 16 (full
    sublanes even for 16-bit inputs) and >= 32 (>= 2 row blocks for megacore), while
    keeping the folded spatial length >= 128 lanes; keep folding up to 128 rows
    while the folded spatial length stays >= 512.
    """
    f = 1
    while (r0 * f) % 16 != 0 or r0 * f < 32:
        if (s0 + 2 * f - 1) // (2 * f) < 128:
            break
        f *= 2
    while r0 * f < 128 and (s0 + 2 * f - 1) // (2 * f) >= 512:
        f *= 2
    return f


def sam_loss(logits_pred, iou_pred, gt2D,
             seg_loss_weight=1.0, ce_loss_weight=1.0, iou_loss_weight=1.0,
             binary_mask=True):
    """JAX forward pass of SAMLoss.

    binary_mask=True assumes gt2D holds only {0, 1} (the SAM setting), allowing the
    kernel to use sum(t) for both sum(t^2) and |t != 0|.  Set False for soft masks.
    """
    B, C = logits_pred.shape[0], logits_pred.shape[1]
    r0 = B * C
    s0 = 1
    for d in logits_pred.shape[2:]:
        s0 *= d

    x = logits_pred.reshape(r0, s0)                 # keep the model's native dtype
    t = gt2D.reshape(r0, s0)
    if t.dtype == jnp.bool_:                        # keep the mask stream narrow
        t = t.astype(jnp.bfloat16 if binary_mask else jnp.float32)

    # Fold spatial into rows (sublane filling + megacore), then pad the folded
    # spatial length to a lane multiple so tiles never fall back to full extent.
    fold = _fold_factor(r0, s0)
    s_fold = (s0 + fold - 1) // fold
    S = ((s_fold + 127) // 128) * 128
    R = r0 * fold
    pad = fold * S - s0
    if pad:
        # Padded logits are very negative, padded mask is 0 -> every statistic gets
        # exactly 0 contribution from padding (exp(-|pad|) == 0 in f32).
        x = jnp.pad(x, ((0, 0), (0, pad)), constant_values=_PAD_LOGIT)
        t = jnp.pad(t, ((0, 0), (0, pad)), constant_values=0)
    x = x.reshape(R, S)
    t = t.reshape(R, S)

    # Tiles: rows capped at 128 (keeps in-kernel f32 temporaries + double-buffered
    # blocks well inside the 32 MiB scoped-VMEM default, incl. v7x's 64 MiB part),
    # with >= 2 row blocks when possible so both v7x TensorCores get work; lanes
    # capped at 2048 (2 MiB-class DMAs near the HBM roofline on every generation).
    tr = _pick_tile(R, 8, max(8, min(128, R // 2))) if R >= 16 else R
    ts = _pick_tile(S, 128, 2048)
    grid = (R // tr, S // ts)

    n_stats = 6 if binary_mask else 7
    stats = pl.pallas_call(
        partial(_sam_stats_kernel, binary_mask=binary_mask),
        out_shape=jax.ShapeDtypeStruct((n_stats, R, 128), jnp.float32),
        grid_spec=pltpu.PrefetchScalarGridSpec(
            num_scalar_prefetch=0,
            grid=grid,
            in_specs=[
                pl.BlockSpec((tr, ts), lambda r, s: (r, s)),
                pl.BlockSpec((tr, ts), lambda r, s: (r, s)),
            ],
            # Same output block for every step of the S (reduction) axis -> the
            # lane-dense stats slab stays resident in VMEM and is stored once per
            # row block with full-width (unmasked) vector stores.
            out_specs=pl.BlockSpec((n_stats, tr, 128), lambda r, s: (0, r, 0)),
        ),
        compiler_params=pltpu.CompilerParams(
            dimension_semantics=("parallel", "arbitrary")),
    )(x, t)

    # Tiny XLA epilogue: one 128-lane reduce per stat, then un-fold the F sub-rows.
    per_row = jnp.sum(stats, axis=-1).reshape(n_stats, r0, fold).sum(axis=-1)

    inter = per_row[0]
    pred_o = per_row[1]
    gt_o = per_row[2]
    bce_sum = per_row[3]
    ih = per_row[4]
    hard_sum = per_row[5]
    gtb_sum = gt_o if binary_mask else per_row[6]

    # monai DiceLoss(sigmoid=True, squared_pred=True, reduction='mean')
    smooth_nr = smooth_dr = 1e-5
    dice = 1.0 - (2.0 * inter + smooth_nr) / (gt_o + pred_o + smooth_dr)
    l_seg = jnp.mean(dice)                          # mean over (B, C)

    # BCEWithLogitsLoss(reduction='mean') over the original (unpadded) elements.
    l_ce = jnp.sum(bce_sum) / (r0 * s0)

    # Hard IoU per batch element (reduce over all non-batch dims).  No epsilon, so an
    # empty union yields NaN/Inf exactly like the PyTorch reference.
    union = hard_sum + gtb_sum - ih
    ih_b = ih.reshape(B, C).sum(axis=1)
    un_b = union.reshape(B, C).sum(axis=1)
    iou_gt = (ih_b / un_b)[:, None]                 # (B, 1)

    # MSELoss(reduction='mean')
    l_iou = jnp.mean((iou_pred.astype(jnp.float32) - iou_gt) ** 2)

    mask_loss = seg_loss_weight * l_seg + ce_loss_weight * l_ce
    return mask_loss + iou_loss_weight * l_iou


if __name__ == "__main__":
    seg_w, ce_w, iou_w = 1.0, 1.0, 1.0

    key = jax.random.PRNGKey(0)
    k1, k2, k3 = jax.random.split(key, 3)

    B, C, H, W = 2, 1, 64, 64
    logits_pred = jax.random.normal(k1, (B, C, H, W), dtype=jnp.float32)
    # SAM ground truth is a binary mask; store it narrow (bf16) to halve its HBM stream.
    gt2D = (jax.random.uniform(k2, (B, C, H, W)) > 0.5).astype(jnp.bfloat16)
    iou_pred = jax.random.uniform(k3, (B, 1), dtype=jnp.float32)

    loss_fn = jax.jit(lambda lp, ip, g: sam_loss(lp, ip, g, seg_w, ce_w, iou_w))
    loss = loss_fn(logits_pred, iou_pred, gt2D)
    jax.block_until_ready(loss)
    print("KERNEL_OK")
</pallas_src>

<mosaic_0001>
module attributes {stable_mosaic.version = 11 : i64} {
  func.func @_sam_stats_kernel(%arg0: i32, %arg1: i32, %arg2: memref<16x256xf32, #tpu.memory_space<vmem>>, %arg3: memref<16x256xbf16, #tpu.memory_space<vmem>>, %arg4: memref<6x16x128xf32, #tpu.memory_space<vmem>>) attributes {dimension_semantics = [#tpu.dimension_semantics<parallel>, #tpu.dimension_semantics<arbitrary>], iteration_bounds = array<i64: 2, 1>, scalar_prefetch = 0 : i64, scratch_operands = 0 : i64, tpu.core_type = #tpu.core_type<tc>, window_params = [{transform_indices = @transform_0, window_bounds = array<i64: 16, 256>}, {transform_indices = @transform_1, window_bounds = array<i64: 16, 256>}, {transform_indices = @transform_2, window_bounds = array<i64: 6, 16, 128>}]} {
    %c0_i32 = arith.constant 0 : i32
    %0 = arith.cmpi eq, %arg1, %c0_i32 : i32
    %1 = arith.extui %0 : i1 to i32
    %c0_i32_0 = arith.constant 0 : i32
    %2 = arith.cmpi ne, %1, %c0_i32_0 : i32
    scf.if %2 {
      %cst_40 = arith.constant 0.000000e+00 : f32
      %85 = vector.broadcast %cst_40 : f32 to vector<6x16x128xf32>
      %c0_41 = arith.constant 0 : index
      %c0_42 = arith.constant 0 : index
      %c0_43 = arith.constant 0 : index
      %86 = vector.load %arg4[%c0_41, %c0_42, %c0_43] : memref<6x16x128xf32, #tpu.memory_space<vmem>>, vector<6x16x128xf32>
      tpu.vector_store %arg4[%c0_41, %c0_42, %c0_43], %85 {strides = array<i32>} : memref<6x16x128xf32, #tpu.memory_space<vmem>>, vector<6x16x128xf32>,
    } else {
    }
    %c0 = arith.constant 0 : index
    %c0_1 = arith.constant 0 : index
    %3 = vector.load %arg2[%c0, %c0_1] : memref<16x256xf32, #tpu.memory_space<vmem>>, vector<16x256xf32>
    %c0_2 = arith.constant 0 : index
    %c0_3 = arith.constant 0 : index
    %4 = vector.load %arg3[%c0_2, %c0_3] : memref<16x256xbf16, #tpu.memory_space<vmem>>, vector<16x256xbf16>
    %5 = arith.extf %4 : vector<16x256xbf16> to vector<16x256xf32>
    %6 = math.absf %3 : vector<16x256xf32>
    %cst = arith.constant 0.000000e+00 : f32
    %7 = vector.broadcast %cst : f32 to vector<16x256xf32>
    %8 = arith.subf %7, %6 : vector<16x256xf32>
    %9 = math.exp %8 : vector<16x256xf32>
    %cst_4 = arith.constant 1.000000e+00 : f32
    %10 = vector.broadcast %cst_4 : f32 to vector<16x256xf32>
    %11 = arith.addf %10, %9 : vector<16x256xf32>
    %12 = tpu.reciprocal %11 : vector<16x256xf32> -> vector<16x256xf32>
    %cst_5 = arith.constant 0.000000e+00 : f32
    %13 = vector.broadcast %cst_5 : f32 to vector<16x256xf32>
    %14 = arith.cmpf oge, %3, %13 : vector<16x256xf32>
    %cst_6 = arith.constant 1.000000e+00 : f32
    %15 = vector.broadcast %cst_6 : f32 to vector<16x256xf32>
    %16 = arith.select %14, %15, %9 : vector<16x256xi1>, vector<16x256xf32>
    %17 = arith.mulf %16, %12 : vector<16x256xf32>
    %cst_7 = arith.constant 0.000000e+00 : f32
    %18 = vector.broadcast %cst_7 : f32 to vector<16x256xf32>
    %19 = arith.cmpf ogt, %3, %18 : vector<16x256xf32>
    %20 = arith.extui %19 : vector<16x256xi1> to vector<16x256xi32>
    %21 = arith.sitofp %20 : vector<16x256xi32> to vector<16x256xf32>
    %22 = arith.subf %21, %5 : vector<16x256xf32>
    %23 = arith.mulf %3, %22 : vector<16x256xf32>
    %cst_8 = arith.constant 1.000000e+00 : f32
    %24 = vector.broadcast %cst_8 : f32 to vector<16x256xf32>
    %25 = arith.addf %24, %9 : vector<16x256xf32>
    %26 = math.log %25 : vector<16x256xf32>
    %27 = arith.addf %23, %26 : vector<16x256xf32>
    %28 = arith.mulf %17, %5 : vector<16x256xf32>
    %29 = arith.mulf %17, %17 : vector<16x256xf32>
    %30 = arith.mulf %21, %5 : vector<16x256xf32>
    %c0_9 = arith.constant 0 : index
    %c0_10 = arith.constant 0 : index
    %c0_11 = arith.constant 0 : index
    %31 = vector.load %arg4[%c0_9, %c0_10, %c0_11] : memref<6x16x128xf32, #tpu.memory_space<vmem>>, vector<1x16x128xf32>
    %32 = vector.shape_cast %31 : vector<1x16x128xf32> to vector<16x128xf32>
    %33 = vector.extract_strided_slice %28 {offsets = [0, 0], sizes = [16, 128], strides = [1, 1]} : vector<16x256xf32> to vector<16x128xf32>
    %34 = vector.extract_strided_slice %28 {offsets = [0, 128], sizes = [16, 128], strides = [1, 1]} : vector<16x256xf32> to vector<16x128xf32>
    %35 = arith.addf %33, %34 : vector<16x128xf32>
    %36 = arith.addf %32, %35 : vector<16x128xf32>
    %c0_12 = arith.constant 0 : index
    %c0_13 = arith.constant 0 : index
    %c0_14 = arith.constant 0 : index
    %37 = vector.load %arg4[%c0_12, %c0_13, %c0_14] : memref<6x16x128xf32, #tpu.memory_space<vmem>>, vector<1x16x128xf32>
    %38 = vector.shape_cast %37 : vector<1x16x128xf32> to vector<16x128xf32>
    %39 = vector.shape_cast %36 : vector<16x128xf32> to vector<1x16x128xf32>
    tpu.vector_store %arg4[%c0_12, %c0_13, %c0_14], %39 {strides = array<i32>} : memref<6x16x128xf32, #tpu.memory_space<vmem>>, vector<1x16x128xf32>,
    %c1 = arith.constant 1 : index
    %c0_15 = arith.constant 0 : index
    %c0_16 = arith.constant 0 : index
    %40 = vector.load %arg4[%c1, %c0_15, %c0_16] : memref<6x16x128xf32, #tpu.memory_space<vmem>>, vector<1x16x128xf32>
    %41 = vector.shape_cast %40 : vector<1x16x128xf32> to vector<16x128xf32>
    %42 = vector.extract_strided_slice %29 {offsets = [0, 0], sizes = [16, 128], strides = [1, 1]} : vector<16x256xf32> to vector<16x128xf32>
    %43 = vector.extract_strided_slice %29 {offsets = [0, 128], sizes = [16, 128], strides = [1, 1]} : vector<16x256xf32> to vector<16x128xf32>
    %44 = arith.addf %42, %43 : vector<16x128xf32>
    %45 = arith.addf %41, %44 : vector<16x128xf32>
    %c1_17 = arith.constant 1 : index
    %c0_18 = arith.constant 0 : index
    %c0_19 = arith.constant 0 : index
    %46 = vector.load %arg4[%c1_17, %c0_18, %c0_19] : memref<6x16x128xf32, #tpu.memory_space<vmem>>, vector<1x16x128xf32>
    %47 = vector.shape_cast %46 : vector<1x16x128xf32> to vector<16x128xf32>
    %48 = vector.shape_cast %45 : vector<16x128xf32> to vector<1x16x128xf32>
    tpu.vector_store %arg4[%c1_17, %c0_18, %c0_19], %48 {strides = array<i32>} : memref<6x16x128xf32, #tpu.memory_space<vmem>>, vector<1x16x128xf32>,
    %c2 = arith.constant 2 : index
    %c0_20 = arith.constant 0 : index
    %c0_21 = arith.constant 0 : index
    %49 = vector.load %arg4[%c2, %c0_20, %c0_21] : memref<6x16x128xf32, #tpu.memory_space<vmem>>, vector<1x16x128xf32>
    %50 = vector.shape_cast %49 : vector<1x16x128xf32> to vector<16x128xf32>
    %51 = vector.extract_strided_slice %5 {offsets = [0, 0], sizes = [16, 128], strides = [1, 1]} : vector<16x256xf32> to vector<16x128xf32>
    %52 = vector.extract_strided_slice %5 {offsets = [0, 128], sizes = [16, 128], strides = [1, 1]} : vector<16x256xf32> to vector<16x128xf32>
    %53 = arith.addf %51, %52 : vector<16x128xf32>
    %54 = arith.addf %50, %53 : vector<16x128xf32>
    %c2_22 = arith.constant 2 : index
    %c0_23 = arith.constant 0 : index
    %c0_24 = arith.constant 0 : index
    %55 = vector.load %arg4[%c2_22, %c0_23, %c0_24] : memref<6x16x128xf32, #tpu.memory_space<vmem>>, vector<1x16x128xf32>
    %56 = vector.shape_cast %55 : vector<1x16x128xf32> to vector<16x128xf32>
    %57 = vector.shape_cast %54 : vector<16x128xf32> to vector<1x16x128xf32>
    tpu.vector_store %arg4[%c2_22, %c0_23, %c0_24], %57 {strides = array<i32>} : memref<6x16x128xf32, #tpu.memory_space<vmem>>, vector<1x16x128xf32>,
    %c3 = arith.constant 3 : index
    %c0_25 = arith.constant 0 : index
    %c0_26 = arith.constant 0 : index
    %58 = vector.load %arg4[%c3, %c0_25, %c0_26] : memref<6x16x128xf32, #tpu.memory_space<vmem>>, vector<1x16x128xf32>
    %59 = vector.shape_cast %58 : vector<1x16x128xf32> to vector<16x128xf32>
    %60 = vector.extract_strided_slice %27 {offsets = [0, 0], sizes = [16, 128], strides = [1, 1]} : vector<16x256xf32> to vector<16x128xf32>
    %61 = vector.extract_strided_slice %27 {offsets = [0, 128], sizes = [16, 128], strides = [1, 1]} : vector<16x256xf32> to vector<16x128xf32>
    %62 = arith.addf %60, %61 : vector<16x128xf32>
    %63 = arith.addf %59, %62 : vector<16x128xf32>
    %c3_27 = arith.constant 3 : index
    %c0_28 = arith.constant 0 : index
    %c0_29 = arith.constant 0 : index
    %64 = vector.load %arg4[%c3_27, %c0_28, %c0_29] : memref<6x16x128xf32, #tpu.memory_space<vmem>>, vector<1x16x128xf32>
    %65 = vector.shape_cast %64 : vector<1x16x128xf32> to vector<16x128xf32>
    %66 = vector.shape_cast %63 : vector<16x128xf32> to vector<1x16x128xf32>
    tpu.vector_store %arg4[%c3_27, %c0_28, %c0_29], %66 {strides = array<i32>} : memref<6x16x128xf32, #tpu.memory_space<vmem>>, vector<1x16x128xf32>,
    %c4 = arith.constant 4 : index
    %c0_30 = arith.constant 0 : index
    %c0_31 = arith.constant 0 : index
    %67 = vector.load %arg4[%c4, %c0_30, %c0_31] : memref<6x16x128xf32, #tpu.memory_space<vmem>>, vector<1x16x128xf32>
    %68 = vector.shape_cast %67 : vector<1x16x128xf32> to vector<16x128xf32>
    %69 = vector.extract_strided_slice %30 {offsets = [0, 0], sizes = [16, 128], strides = [1, 1]} : vector<16x256xf32> to vector<16x128xf32>
    %70 = vector.extract_strided_slice %30 {offsets = [0, 128], sizes = [16, 128], strides = [1, 1]} : vector<16x256xf32> to vector<16x128xf32>
    %71 = arith.addf %69, %70 : vector<16x128xf32>
    %72 = arith.addf %68, %71 : vector<16x128xf32>
    %c4_32 = arith.constant 4 : index
    %c0_33 = arith.constant 0 : index
    %c0_34 = arith.constant 0 : index
    %73 = vector.load %arg4[%c4_32, %c0_33, %c0_34] : memref<6x16x128xf32, #tpu.memory_space<vmem>>, vector<1x16x128xf32>
    %74 = vector.shape_cast %73 : vector<1x16x128xf32> to vector<16x128xf32>
    %75 = vector.shape_cast %72 : vector<16x128xf32> to vector<1x16x128xf32>
    tpu.vector_store %arg4[%c4_32, %c0_33, %c0_34], %75 {strides = array<i32>} : memref<6x16x128xf32, #tpu.memory_space<vmem>>, vector<1x16x128xf32>,
    %c5 = arith.constant 5 : index
    %c0_35 = arith.constant 0 : index
    %c0_36 = arith.constant 0 : index
    %76 = vector.load %arg4[%c5, %c0_35, %c0_36] : memref<6x16x128xf32, #tpu.memory_space<vmem>>, vector<1x16x128xf32>
    %77 = vector.shape_cast %76 : vector<1x16x128xf32> to vector<16x128xf32>
    %78 = vector.extract_strided_slice %21 {offsets = [0, 0], sizes = [16, 128], strides = [1, 1]} : vector<16x256xf32> to vector<16x128xf32>
    %79 = vector.extract_strided_slice %21 {offsets = [0, 128], sizes = [16, 128], strides = [1, 1]} : vector<16x256xf32> to vector<16x128xf32>
    %80 = arith.addf %78, %79 : vector<16x128xf32>
    %81 = arith.addf %77, %80 : vector<16x128xf32>
    %c5_37 = arith.constant 5 : index
    %c0_38 = arith.constant 0 : index
    %c0_39 = arith.constant 0 : index
    %82 = vector.load %arg4[%c5_37, %c0_38, %c0_39] : memref<6x16x128xf32, #tpu.memory_space<vmem>>, vector<1x16x128xf32>
    %83 = vector.shape_cast %82 : vector<1x16x128xf32> to vector<16x128xf32>
    %84 = vector.shape_cast %81 : vector<16x128xf32> to vector<1x16x128xf32>
    tpu.vector_store %arg4[%c5_37, %c0_38, %c0_39], %84 {strides = array<i32>} : memref<6x16x128xf32, #tpu.memory_space<vmem>>, vector<1x16x128xf32>,
    return
  }
  func.func @transform_0(%arg0: i32, %arg1: i32) -> (i32, i32) {
    %c0_i32 = arith.constant 0 : i32
    return %arg0, %arg1 : i32, i32
  }
  func.func @transform_1(%arg0: i32, %arg1: i32) -> (i32, i32) {
    %c0_i32 = arith.constant 0 : i32
    return %arg0, %arg1 : i32, i32
  }
  func.func @transform_2(%arg0: i32, %arg1: i32) -> (i32, i32, i32) {
    %c0_i32 = arith.constant 0 : i32
    %c0_i32_0 = arith.constant 0 : i32
    %c0_i32_1 = arith.constant 0 : i32
    return %c0_i32, %arg0, %c0_i32_0 : i32, i32, i32
  }
}

</mosaic_0001>

<llo_original>
// kernel: _lambda_.1
$region0: #{_lambda_.1}
  #allocation0 [shape = 'u32[]', space=smem, size = 0x4, offset = 0x4, fixed_abs, tag = 'smem constant byte address 0x4 - core index']
  #allocation1 [shape = 'u32[144,128]{1,0:T(1,128)}', space=vmem, size = 0x12000, scoped, tag = 'internal scratch']
  %s0 = inlined_call_operand.vmem [shape: f32[32,256], index: 0, kind: input, shape index: {}]
  %s1 = inlined_call_operand.vmem [shape: bf16[32,256], index: 1, kind: input, shape index: {}]
  %s2 = inlined_call_operand.vmem [shape: f32[6,32,128], index: 2, kind: output, shape index: {}]
  %s3 = sld [smem:[#allocation0]]
  $region79: #{_lambda_.1} parent=0
    _
  %s5 = ssub.s32 1, %s3
  %s6 = scalar_select 0, %s5, %s3
  $region1: #{_lambda_.1} parent=0
    #allocation2 [shape = 'u8[98304]{0}', space=vmem, size = 0x18000, scoped, tag = 'output window, operand 0']
    loop: start=0, step=1, limit=4
    $region2: #{_lambda_.1} parent=1 // loop_pre_header
      _
    $region3: #{_lambda_.1} parent=1 // loop_header
      %s8 = sphi 0, %s12
      %p9 = scmp.ge.s32.totalorder %s8, 4
      %s15 = sphi 0, %s27
      %s16 = sphi 0, %s23
      %s17 = sphi 0, %s15
      %s18 = sphi 0, %s16
      %s19 = sphi 0, %s17
      %s20 = sphi 0, %s18
      %s32 = sphi 0, %s34
      %s35 = sphi 0, %s32
      %s36 = sphi 0, %s35
      %s52 = sphi 0, %s36
      %s60 = sphi 0, %s62
      %s63 = sphi 0, %s60
      %s64 = sphi 0, %s63
      %s80 = sphi 0, %s64
      %s86 = sphi 0, %s88
      %s89 = sphi 0, %s86
      %s90 = sphi 0, %s89
      %s106 = sphi 0, %s90
    $region4: #{_lambda_.1} parent=1 // loop_header_branch
      %11 = sbr.rel (%p9) target = $region8
    $region5: #{_lambda_.1} parent=1 // loop_body
      %s13 = ssub.s32 %s8, 1
      %s14 = ssub.s32 %s8, 2
      %s21 = sadd.s32 1, %s16
      %p22 = scmp.ge.s32.totalorder %s21, 1
      %s23 = scalar_select %p22, 0, %s21
      %s24 = sadd.s32 1, %s15
      %s25 = scalar_select %p22, %s24, %s15
      %p26 = scmp.ge.s32.totalorder %s25, 2
      %s27 = scalar_select %p26, 0, %s25
      %s28 = ssub.s32 %s15, %s27
      %s29 = ssub.s32 %s16, %s23
      %s30 = sor.u32 %s28, %s29
      %p31 = scmp.eq.s32.totalorder %s30, 0
      %s33 = sadd.s32 %s32, 1
      %s34 = scalar_select %p31, %s32, %s33
      %p37 = pneg %p31
      %p38 = scmp.eq.s32.totalorder %s8, 1
      %p39 = por %p37, %p38
      %p40 = scmp.ne.s32.totalorder %s32, %s35
      %p41 = scmp.eq.s32.totalorder %s8, 0
      %p42 = por %p40, %p41
      %p43 = scmp.ne.s32.totalorder %s32, %s35
      %p44 = scmp.eq.s32.totalorder %s13, 1
      %p45 = por %p43, %p44
      %p46 = scmp.ne.s32.totalorder %s35, %s36
      %p47 = scmp.eq.s32.totalorder %s13, 0
      %p48 = por %p46, %p47
      %p49 = scmp.ne.s32.totalorder %s35, %s36
      %p50 = scmp.eq.s32.totalorder %s14, 1
      %p51 = por %p49, %p50
      %p53 = scmp.ne.s32.totalorder %s36, %s52
      %p54 = scmp.eq.s32.totalorder %s14, 0
      %p55 = por %p53, %p54
      %s56 = ssub.s32 %s15, %s27
      %s57 = ssub.s32 %s16, %s23
      %s58 = sor.u32 %s56, %s57
      %p59 = scmp.eq.s32.totalorder %s58, 0
      %s61 = sadd.s32 %s60, 1
      %s62 = scalar_select %p59, %s60, %s61
      %p65 = pneg %p59
      %p66 = scmp.eq.s32.totalorder %s8, 1
      %p67 = por %p65, %p66
      %p68 = scmp.ne.s32.totalorder %s60, %s63
      %p69 = scmp.eq.s32.totalorder %s8, 0
      %p70 = por %p68, %p69
      %p71 = scmp.ne.s32.totalorder %s60, %s63
      %p72 = scmp.eq.s32.totalorder %s13, 1
      %p73 = por %p71, %p72
      %p74 = scmp.ne.s32.totalorder %s63, %s64
      %p75 = scmp.eq.s32.totalorder %s13, 0
      %p76 = por %p74, %p75
      %p77 = scmp.ne.s32.totalorder %s63, %s64
      %p78 = scmp.eq.s32.totalorder %s14, 1
      %p79 = por %p77, %p78
      %p81 = scmp.ne.s32.totalorder %s64, %s80
      %p82 = scmp.eq.s32.totalorder %s14, 0
      %p83 = por %p81, %p82
      %s84 = ssub.s32 %s15, %s27
      %p85 = scmp.eq.s32.totalorder %s84, 0
      %s87 = sadd.s32 %s86, 1
      %s88 = scalar_select %p85, %s86, %s87
      %p91 = pneg %p85
      %p92 = scmp.eq.s32.totalorder %s8, 1
      %p93 = por %p91, %p92
      %p94 = scmp.ne.s32.totalorder %s86, %s89
      %p95 = scmp.eq.s32.totalorder %s8, 0
      %p96 = por %p94, %p95
      %p97 = scmp.ne.s32.totalorder %s86, %s89
      %p98 = scmp.eq.s32.totalorder %s13, 1
      %p99 = por %p97, %p98
      %p100 = scmp.ne.s32.totalorder %s89, %s90
      %p101 = scmp.eq.s32.totalorder %s13, 0
      %p102 = por %p100, %p101
      %p103 = scmp.ne.s32.totalorder %s89, %s90
      %p104 = scmp.eq.s32.totalorder %s14, 1
      %p105 = por %p103, %p104
      %p107 = scmp.ne.s32.totalorder %s90, %s106
      %p108 = scmp.eq.s32.totalorder %s14, 0
      %p109 = por %p107, %p108
      %p110 = scmp.le.s32.totalorder 1, %s8
      %p111 = scmp.lt.s32.totalorder %s8, 3
      %p112 = pnand %p110, %p111
      %p113 = pneg %p112
      // Predicated region
      $region9: #{_lambda_.1} parent=5 // pred_check
        _
      $region10: #{_lambda_.1} parent=5 // pred_check_branch
        %115 = sbr.rel (%p112) target = $region12
      $region11: #{_lambda_.1} parent=5 // pred_region
        %s116 = ssub.s32 %s8, 1
      $region12: #{_lambda_.1} parent=5 // pred_fallthru
        _
      %p117 = scmp.lt.s32.totalorder %s8, 2
      // Predicated region
      $region13: #{_lambda_.1} parent=5 // pred_check
        %p118 = pneg %p117
      $region14: #{_lambda_.1} parent=5 // pred_check_branch
        %120 = sbr.rel (%p118) target = $region16
      $region15: #{_lambda_.1} parent=5 // pred_region
        // Predicated region
        $region17: #{_lambda_.1} parent=15 // pred_check
          %p121 = pneg %p42
        $region18: #{_lambda_.1} parent=15 // pred_check_branch
          %123 = sbr.rel (%p121) target = $region20
        $region19: #{_lambda_.1} parent=15 // pred_region
          %s124 = smul.u32 2, %s15
          %s125 = smul.u32 2, %s16
          %p126 = scmp.lt.s32.totalorder %s124, 3
          %s127 = scalar_select %p126, %s124, 3
          %p128 = scmp.lt.s32.totalorder %s125, 1
          %s129 = scalar_select %p128, %s125, 1
          %s130 = smul.addr %s127, 2
          %s131 = sadd.s32 %s129, %s130
          %s132 = smul.addr %s131, 8
          %s133 = scalar_lea.vmem %s0, %s132
          %s134 = smul.u32 2, %s15
          %s135 = smul.u32 2, %s16
        $region20: #{_lambda_.1} parent=15 // pred_fallthru
          _
        // Predicated region
        $region21: #{_lambda_.1} parent=15 // pred_check
          %p136 = pneg %p70
        $region22: #{_lambda_.1} parent=15 // pred_check_branch
          %138 = sbr.rel (%p136) target = $region24
        $region23: #{_lambda_.1} parent=15 // pred_region
          %s139 = smul.u32 2, %s15
          %s140 = smul.u32 2, %s16
          %p141 = scmp.lt.s32.totalorder %s139, 3
          %s142 = scalar_select %p141, %s139, 3
          %p143 = scmp.lt.s32.totalorder %s140, 1
          %s144 = scalar_select %p143, %s140, 1
          %s145 = smul.addr %s142, 2
          %s146 = sadd.s32 %s144, %s145
          %s147 = smul.addr %s146, 4
          %s148 = scalar_lea.vmem %s1, %s147
          %s149 = smul.u32 2, %s15
          %s150 = smul.u32 2, %s16
        $region24: #{_lambda_.1} parent=15 // pred_fallthru
          _
      $region16: #{_lambda_.1} parent=5 // pred_fallthru
        _
      %p151 = scmp.le.s32.totalorder 1, %s8
      %p152 = scmp.lt.s32.totalorder %s8, 3
      %p153 = pnand %p151, %p152
      %p154 = pneg %p153
      // Predicated region
      $region25: #{_lambda_.1} parent=5 // pred_check
        _
      $region26: #{_lambda_.1} parent=5 // pred_check_branch
        %156 = sbr.rel (%p153) target = $region28
      $region27: #{_lambda_.1} parent=5 // pred_region
        %s157 = ssub.s32 %s8, 1
        %s158 = smul.u32 2, %s17
        %s159 = smul.u32 2, %s18
        %p160 = scmp.lt.s32.totalorder %s158, 3
        %s161 = scalar_select %p160, %s158, 3
        %p162 = scmp.lt.s32.totalorder %s159, 1
        %s163 = scalar_select %p162, %s159, 1
        %s164 = smul.addr %s161, 2
        %s165 = sadd.s32 %s163, %s164
        %s166 = smul.addr %s165, 8
        %s167 = scalar_lea.vmem %s0, %s166
        %p168 = pneg %p48
        %p169 = pneg %p45
        %s170 = smul.u32 2, %s17
        %s171 = smul.u32 2, %s18
        %p172 = scmp.lt.s32.totalorder %s170, 3
        %s173 = scalar_select %p172, %s170, 3
        %p174 = scmp.lt.s32.totalorder %s171, 1
        %s175 = scalar_select %p174, %s171, 1
        %s176 = smul.addr %s173, 2
        %s177 = sadd.s32 %s175, %s176
        %s178 = smul.addr %s177, 4
        %s179 = scalar_lea.vmem %s1, %s178
        %p180 = pneg %p76
        %p181 = pneg %p73
        %p182 = pneg %p102
        %p183 = pneg %p99
        %s184 = sand.u32 %s89, 1
        %s185 = sand.u32 %s89, 1
        %s186 = smul.addr %s185, 96
        %s187 = scalar_lea.vmem [#allocation2], %s186
        %s188 = smul.u32 2, %s17
        %s189 = smul.u32 2, %s18
        %p190 = scmp.lt.s32.totalorder %s188, 3
        %s191 = scalar_select %p190, %s188, 3
        %p192 = scmp.lt.s32.totalorder %s189, 1
        %s193 = scalar_select %p192, %s189, 1
        %s194 = smul.addr %s191, 2
        %s195 = sadd.s32 %s193, %s194
        %s196 = smul.addr %s195, 8
        %s197 = scalar_lea.vmem %s0, %s196
        %s198 = smul.u32 2, %s17
        %s199 = smul.u32 2, %s18
        %s200 = smul.u32 2, %s17
        %s201 = smul.u32 2, %s18
        %p202 = scmp.lt.s32.totalorder %s200, 3
        %s203 = scalar_select %p202, %s200, 3
        %p204 = scmp.lt.s32.totalorder %s201, 1
        %s205 = scalar_select %p204, %s201, 1
        %s206 = smul.addr %s203, 2
        %s207 = sadd.s32 %s205, %s206
        %s208 = smul.addr %s207, 4
        %s209 = scalar_lea.vmem %s1, %s208
        %s210 = smul.u32 2, %s17
        %s211 = smul.u32 2, %s18
        %s212 = smul.u32 2, %s17
        %p213 = scmp.eq.s32.totalorder %s18, 0
        // Predicated region
        $region29: #{_lambda_.1} parent=27 // pred_check
          %p214 = pneg %p213
        $region30: #{_lambda_.1} parent=27 // pred_check_branch
          %216 = sbr.rel (%p214) target = $region32
        $region31: #{_lambda_.1} parent=27 // pred_region
          %217 = vst [vmem:[%s187] sm:$0xff] 0.0
          %218 = vst [vmem:[%s187 + $0x8] sm:$0xff] 0.0
          %219 = vst [vmem:[%s187 + $0x10] sm:$0xff] 0.0
          %220 = vst [vmem:[%s187 + $0x18] sm:$0xff] 0.0
          %221 = vst [vmem:[%s187 + $0x20] sm:$0xff] 0.0
          %222 = vst [vmem:[%s187 + $0x28] sm:$0xff] 0.0
          %223 = vst [vmem:[%s187 + $0x30] sm:$0xff] 0.0
          %224 = vst [vmem:[%s187 + $0x38] sm:$0xff] 0.0
          %225 = vst [vmem:[%s187 + $0x40] sm:$0xff] 0.0
          %226 = vst [vmem:[%s187 + $0x48] sm:$0xff] 0.0
          %227 = vst [vmem:[%s187 + $0x50] sm:$0xff] 0.0
          %228 = vst [vmem:[%s187 + $0x58] sm:$0xff] 0.0
        $region32: #{_lambda_.1} parent=27 // pred_fallthru
          _
        %v229 = vld [vmem:[%s197] sm:$0xff]
        %v230 = vld [vmem:[%s197 + $0x8] sm:$0xff]
        %v231 = vld [vmem:[%s197 + $0x10] sm:$0xff]
        %v232 = vld [vmem:[%s197 + $0x18] sm:$0xff]
        %v233 = vld [vmem:[%s209] sm:$0xff]
        %v234 = vld [vmem:[%s209 + $0x8] sm:$0xff]
        %v235 = vunpack.c.l.bf16 %v233
        %v236 = vunpack.c.h.bf16 %v233
        %v237 = vunpack.c.l.bf16 %v234
        %v238 = vunpack.c.h.bf16 %v234
        %v239 = vand.u32 2147483647, %v229
        %v240 = vand.u32 2147483647, %v230
        %v241 = vand.u32 2147483647, %v231
        %v242 = vand.u32 2147483647, %v232
        %v243 = vsub.f32 0.0, %v239
        %v244 = vsub.f32 0.0, %v240
        %v245 = vsub.f32 0.0, %v241
        %v246 = vsub.f32 0.0, %v242
        %v247 = vmul.f32 %v243, 1.442695
        %v248 = vpow.pop %v247
        %v249 = vmul.f32 %v244, 1.442695
        %v250 = vpow.pop %v249
        %v251 = vmul.f32 %v245, 1.442695
        %v252 = vpow.pop %v251
        %v253 = vmul.f32 %v246, 1.442695
        %v254 = vpow.pop %v253
        %v255 = vadd.f32 %v248, 1.0
        %v256 = vadd.f32 %v250, 1.0
        %v257 = vadd.f32 %v252, 1.0
        %v258 = vadd.f32 %v254, 1.0
        %v259 = vrcp.pop %v255
        %v260 = vrcp.pop %v256
        %v261 = vrcp.pop %v257
        %v262 = vrcp.pop %v258
        %vm263 = vcmp.ge.f32.partialorder %v229, 0.0
        %vm264 = vcmp.ge.f32.partialorder %v230, 0.0
        %vm265 = vcmp.ge.f32.partialorder %v231, 0.0
        %vm266 = vcmp.ge.f32.partialorder %v232, 0.0
        %v267 = vsel %vm263, 1.0, %v248
        %v268 = vsel %vm264, 1.0, %v250
        %v269 = vsel %vm265, 1.0, %v252
        %v270 = vsel %vm266, 1.0, %v254
        %v271 = vmul.f32 %v267, %v259
        %v272 = vmul.f32 %v268, %v260
        %v273 = vmul.f32 %v269, %v261
        %v274 = vmul.f32 %v270, %v262
        %vm275 = vcmp.gt.f32.partialorder %v229, 0.0
        %vm276 = vcmp.gt.f32.partialorder %v230, 0.0
        %vm277 = vcmp.gt.f32.partialorder %v231, 0.0
        %vm278 = vcmp.gt.f32.partialorder %v232, 0.0
        %v279 = vsel %vm275, 1, 0
        %v280 = vsel %vm276, 1, 0
        %v281 = vsel %vm277, 1, 0
        %v282 = vsel %vm278, 1, 0
        %v283 = vcvt.s32.f32 %v279
        %v284 = vcvt.s32.f32 %v280
        %v285 = vcvt.s32.f32 %v281
        %v286 = vcvt.s32.f32 %v282
        %v287 = vsub.f32 %v283, %v235
        %v288 = vsub.f32 %v284, %v236
        %v289 = vsub.f32 %v285, %v237
        %v290 = vsub.f32 %v286, %v238
        %v291 = vmul.f32 %v229, %v287
        %v292 = vmul.f32 %v230, %v288
        %v293 = vmul.f32 %v231, %v289
        %v294 = vmul.f32 %v232, %v290
        %v295 = vlog2.pop %v255
        %v296 = vmul.f32 %v295, 0.6931472
        %v297 = vlog2.pop %v256
        %v298 = vmul.f32 %v297, 0.6931472
        %v299 = vlog2.pop %v257
        %v300 = vmul.f32 %v299, 0.6931472
        %v301 = vlog2.pop %v258
        %v302 = vmul.f32 %v301, 0.6931472
        %v303 = vadd.f32 %v291, %v296
        %v304 = vadd.f32 %v292, %v298
        %v305 = vadd.f32 %v293, %v300
        %v306 = vadd.f32 %v294, %v302
        %v307 = vmul.f32 %v271, %v235
        %v308 = vmul.f32 %v272, %v236
        %v309 = vmul.f32 %v273, %v237
        %v310 = vmul.f32 %v274, %v238
        %v311 = vmul.f32 %v271, %v271
        %v312 = vmul.f32 %v272, %v272
        %v313 = vmul.f32 %v273, %v273
        %v314 = vmul.f32 %v274, %v274
        %v315 = vmul.f32 %v283, %v235
        %v316 = vmul.f32 %v284, %v236
        %v317 = vmul.f32 %v285, %v237
        %v318 = vmul.f32 %v286, %v238
        %v319 = vld [vmem:[%s187] sm:$0xff]
        %v320 = vld [vmem:[%s187 + $0x8] sm:$0xff]
        %v321 = vadd.f32 %v307, %v308
        %v322 = vadd.f32 %v309, %v310
        %v323 = vadd.f32 %v319, %v321
        %v324 = vadd.f32 %v320, %v322
        %325 = vst [vmem:[%s187] sm:$0xff] %v323
        %326 = vst [vmem:[%s187 + $0x8] sm:$0xff] %v324
        %s327 = scalar_lea.vmem %s187, 16 [#allocation2]
        %v328 = vld [vmem:[%s327] sm:$0xff]
        %v329 = vld [vmem:[%s327 + $0x8] sm:$0xff]
        %v330 = vadd.f32 %v311, %v312
        %v331 = vadd.f32 %v313, %v314
        %v332 = vadd.f32 %v328, %v330
        %v333 = vadd.f32 %v329, %v331
        %334 = vst [vmem:[%s327] sm:$0xff] %v332
        %335 = vst [vmem:[%s327 + $0x8] sm:$0xff] %v333
        %s336 = scalar_lea.vmem %s187, 32 [#allocation2]
        %v337 = vld [vmem:[%s336] sm:$0xff]
        %v338 = vld [vmem:[%s336 + $0x8] sm:$0xff]
        %v339 = vadd.f32 %v235, %v236
        %v340 = vadd.f32 %v237, %v238
        %v341 = vadd.f32 %v337, %v339
        %v342 = vadd.f32 %v338, %v340
        %343 = vst [vmem:[%s336] sm:$0xff] %v341
        %344 = vst [vmem:[%s336 + $0x8] sm:$0xff] %v342
        %s345 = scalar_lea.vmem %s187, 48 [#allocation2]
        %v346 = vld [vmem:[%s345] sm:$0xff]
        %v347 = vld [vmem:[%s345 + $0x8] sm:$0xff]
        %v348 = vadd.f32 %v303, %v304
        %v349 = vadd.f32 %v305, %v306
        %v350 = vadd.f32 %v346, %v348
        %v351 = vadd.f32 %v347, %v349
        %352 = vst [vmem:[%s345] sm:$0xff] %v350
        %353 = vst [vmem:[%s345 + $0x8] sm:$0xff] %v351
        %s354 = scalar_lea.vmem %s187, 64 [#allocation2]
        %v355 = vld [vmem:[%s354] sm:$0xff]
        %v356 = vld [vmem:[%s354 + $0x8] sm:$0xff]
        %v357 = vadd.f32 %v315, %v316
        %v358 = vadd.f32 %v317, %v318
        %v359 = vadd.f32 %v355, %v357
        %v360 = vadd.f32 %v356, %v358
        %361 = vst [vmem:[%s354] sm:$0xff] %v359
        %362 = vst [vmem:[%s354 + $0x8] sm:$0xff] %v360
        %s363 = scalar_lea.vmem %s187, 80 [#allocation2]
        %v364 = vld [vmem:[%s363] sm:$0xff]
        %v365 = vld [vmem:[%s363 + $0x8] sm:$0xff]
        %v366 = vadd.f32 %v283, %v284
        %v367 = vadd.f32 %v285, %v286
        %v368 = vadd.f32 %v364, %v366
        %v369 = vadd.f32 %v365, %v367
        %370 = vst [vmem:[%s363] sm:$0xff] %v368
        %371 = vst [vmem:[%s363 + $0x8] sm:$0xff] %v369
        %s372 = sand.u32 %s89, 1
        %s373 = sand.u32 %s89, 1
        %s374 = smul.addr %s373, 96
        %s375 = scalar_lea.vmem [#allocation2], %s374
        // Predicated region
        $region33: #{_lambda_.1} parent=27 // pred_check
          %p376 = pneg %p99
        $region34: #{_lambda_.1} parent=27 // pred_check_branch
          %378 = sbr.rel (%p376) target = $region36
        $region35: #{_lambda_.1} parent=27 // pred_region
          %s379 = smul.u32 2, %s17
          %s380 = smul.addr %s379, 8
          %s381 = scalar_lea.vmem %s2, %s380
          // Predicated region
          $region37: #{_lambda_.1} parent=35 // pred_check
            _
          $region38: #{_lambda_.1} parent=35 // pred_check_branch
            %383 = sbr.rel (0) target = $region40
          $region39: #{_lambda_.1} parent=35 // pred_region
            // Predicated region
            $region41: #{_lambda_.1} parent=39 // pred_check
              _
            $region42: #{_lambda_.1} parent=39 // pred_check_branch
              %385 = sbr.rel (0) target = $region44
            $region43: #{_lambda_.1} parent=39 // pred_region
              // Predicated region
              $region56: #{_lambda_.1} parent=43 // pred_check
                _
              $region57: #{_lambda_.1} parent=43 // pred_check_branch
                %423 = sbr.rel (0) target = $region59
              $region58: #{_lambda_.1} parent=43 // pred_region
                loop: start=0, step=1, limit=1
                $region60: #{_lambda_.1} parent=58 // loop_pre_header
                  _
                $region61: #{_lambda_.1} parent=58 // loop_header
                  %s425 = sphi 0, %s429
                  %p426 = scmp.ge.s32.totalorder %s425, 1
                  %s430 = sphi %s375, %s375
                  %s431 = sphi %s381, %s381
                $region62: #{_lambda_.1} parent=58 // loop_header_branch
                  %428 = sbr.rel (%p426) target = $region66
                $region63: #{_lambda_.1} parent=58 // loop_body
                  %v432 = vld [vmem:[%s430] sm:$0xff]
                  %433 = vst [vmem:[%s431] sm:$0xff] %v432
                  %v434 = vld [vmem:[%s430 + $0x8] sm:$0xff]
                  %435 = vst [vmem:[%s431 + $0x8] sm:$0xff] %v434
                  %v436 = vld [vmem:[%s430 + $0x10] sm:$0xff]
                  %437 = vst [vmem:[%s431 + $0x20] sm:$0xff] %v436
                  %v438 = vld [vmem:[%s430 + $0x18] sm:$0xff]
                  %439 = vst [vmem:[%s431 + $0x28] sm:$0xff] %v438
                  %v440 = vld [vmem:[%s430 + $0x20] sm:$0xff]
                  %441 = vst [vmem:[%s431 + $0x40] sm:$0xff] %v440
                  %v442 = vld [vmem:[%s430 + $0x28] sm:$0xff]
                  %443 = vst [vmem:[%s431 + $0x48] sm:$0xff] %v442
                  %v444 = vld [vmem:[%s430 + $0x30] sm:$0xff]
                  %445 = vst [vmem:[%s431 + $0x60] sm:$0xff] %v444
                  %v446 = vld [vmem:[%s430 + $0x38] sm:$0xff]
                  %447 = vst [vmem:[%s431 + $0x68] sm:$0xff] %v446
                  %v448 = vld [vmem:[%s430 + $0x40] sm:$0xff]
                  %449 = vst [vmem:[%s431 + $0x80] sm:$0xff] %v448
                  %v450 = vld [vmem:[%s430 + $0x48] sm:$0xff]
                  %451 = vst [vmem:[%s431 + $0x88] sm:$0xff] %v450
                  %v452 = vld [vmem:[%s430 + $0x50] sm:$0xff]
                  %453 = vst [vmem:[%s431 + $0xa0] sm:$0xff] %v452
                  %v454 = vld [vmem:[%s430 + $0x58] sm:$0xff]
                  %455 = vst [vmem:[%s431 + $0xa8] sm:$0xff] %v454
                $region64: #{_lambda_.1} parent=58 // loop_footer
                  %s429 = sadd.s32 1, %s425
                $region65: #{_lambda_.1} parent=58 // loop_footer_branch
                  %424 = sbr.rel target = $region61
                $region66: #{_lambda_.1} parent=58 // loop_exit
                  _
              $region59: #{_lambda_.1} parent=43 // pred_fallthru
                _
              // Predicated region
              $region67: #{_lambda_.1} parent=43 // pred_check
                _
              $region68: #{_lambda_.1} parent=43 // pred_check_branch
                %457 = sbr.rel target = $region70
              $region69: #{_lambda_.1} parent=43 // pred_region
                _
              $region70: #{_lambda_.1} parent=43 // pred_fallthru
                _
            $region44: #{_lambda_.1} parent=39 // pred_fallthru
              _
            // Predicated region
            $region45: #{_lambda_.1} parent=39 // pred_check
              _
            $region46: #{_lambda_.1} parent=39 // pred_check_branch
              %387 = sbr.rel target = $region48
            $region47: #{_lambda_.1} parent=39 // pred_region
              %s389 = ssub.s32 256, 1
              loop: start=0, step=1, limit=1
              $region49: #{_lambda_.1} parent=47 // loop_pre_header
                _
              $region50: #{_lambda_.1} parent=47 // loop_header
                %s391 = sphi 0, %s395
                %p392 = scmp.ge.s32.totalorder %s391, 1
                %s396 = sphi %s375, %s375
                %s397 = sphi %s381, %s381
              $region51: #{_lambda_.1} parent=47 // loop_header_branch
                %394 = sbr.rel (%p392) target = $region55
              $region52: #{_lambda_.1} parent=47 // loop_body
                %v398 = vld [vmem:[%s396] sm:%s389]
                %399 = vst [vmem:[%s397] sm:%s389] %v398
                %v400 = vld [vmem:[%s396 + $0x8] sm:%s389]
                %401 = vst [vmem:[%s397 + $0x8] sm:%s389] %v400
                %v402 = vld [vmem:[%s396 + $0x10] sm:%s389]
                %403 = vst [vmem:[%s397 + $0x20] sm:%s389] %v402
                %v404 = vld [vmem:[%s396 + $0x18] sm:%s389]
                %405 = vst [vmem:[%s397 + $0x28] sm:%s389] %v404
                %v406 = vld [vmem:[%s396 + $0x20] sm:%s389]
                %407 = vst [vmem:[%s397 + $0x40] sm:%s389] %v406
                %v408 = vld [vmem:[%s396 + $0x28] sm:%s389]
                %409 = vst [vmem:[%s397 + $0x48] sm:%s389] %v408
                %v410 = vld [vmem:[%s396 + $0x30] sm:%s389]
                %411 = vst [vmem:[%s397 + $0x60] sm:%s389] %v410
                %v412 = vld [vmem:[%s396 + $0x38] sm:%s389]
                %413 = vst [vmem:[%s397 + $0x68] sm:%s389] %v412
                %v414 = vld [vmem:[%s396 + $0x40] sm:%s389]
                %415 = vst [vmem:[%s397 + $0x80] sm:%s389] %v414
                %v416 = vld [vmem:[%s396 + $0x48] sm:%s389]
                %417 = vst [vmem:[%s397 + $0x88] sm:%s389] %v416
                %v418 = vld [vmem:[%s396 + $0x50] sm:%s389]
                %419 = vst [vmem:[%s397 + $0xa0] sm:%s389] %v418
                %v420 = vld [vmem:[%s396 + $0x58] sm:%s389]
                %421 = vst [vmem:[%s397 + $0xa8] sm:%s389] %v420
              $region53: #{_lambda_.1} parent=47 // loop_footer
                %s395 = sadd.s32 1, %s391
              $region54: #{_lambda_.1} parent=47 // loop_footer_branch
                %390 = sbr.rel target = $region50
              $region55: #{_lambda_.1} parent=47 // loop_exit
                _
            $region48: #{_lambda_.1} parent=39 // pred_fallthru
              _
          $region40: #{_lambda_.1} parent=35 // pred_fallthru
            _
          %458 = vnop
        $region36: #{_lambda_.1} parent=27 // pred_fallthru
          _
      $region28: #{_lambda_.1} parent=5 // pred_fallthru
        _
      %p459 = scmp.le.s32.totalorder 2, %s8
      // Predicated region
      $region71: #{_lambda_.1} parent=5 // pred_check
        %p460 = pneg %p459
      $region72: #{_lambda_.1} parent=5 // pred_check_branch
        %462 = sbr.rel (%p460) target = $region74
      $region73: #{_lambda_.1} parent=5 // pred_region
        %s463 = ssub.s32 %s8, 2
        // Predicated region
        $region75: #{_lambda_.1} parent=73 // pred_check
          %p464 = pneg %p105
        $region76: #{_lambda_.1} parent=73 // pred_check_branch
          %466 = sbr.rel (%p464) target = $region78
        $region77: #{_lambda_.1} parent=73 // pred_region
          %s467 = sand.u32 %s90, 1
          %s468 = sand.u32 %s90, 1
          %s469 = smul.addr %s468, 96
          %s470 = scalar_lea.vmem [#allocation2], %s469
        $region78: #{_lambda_.1} parent=73 // pred_fallthru
          _
      $region74: #{_lambda_.1} parent=5 // pred_fallthru
        _
    $region6: #{_lambda_.1} parent=1 // loop_footer
      %s12 = sadd.s32 1, %s8
    $region7: #{_lambda_.1} parent=1 // loop_footer_branch
      %7 = sbr.rel target = $region3
    $region8: #{_lambda_.1} parent=1 // loop_exit
      _

</llo_original>
